<compile_context>
chip_gen: v6e
topology: v6e:2x2x1
jax: 0.10.0
libtpu: 0.0.40
codegen_flags: <defaults>
</compile_context>

<pallas_src>
import jax
import jax.numpy as jnp
from jax.experimental import pallas as pl
from jax.experimental.pallas import tpu as pltpu


def _conv1x1_kernel(x_ref, w_ref, b_ref, o_ref, acc_ref):
    # x_ref: (1, TK, THW)   w_ref: (TCO, TK)   b_ref: (TCO, 1)
    # o_ref: (1, TCO, THW)  acc_ref: (TCO, THW) f32 scratch
    k = pl.program_id(3)

    @pl.when(k == 0)
    def _():
        acc_ref[...] = jnp.zeros_like(acc_ref)

    acc_ref[...] += jnp.dot(w_ref[...], x_ref[0],
                            preferred_element_type=jnp.float32)

    @pl.when(k == pl.num_programs(3) - 1)
    def _():
        o_ref[0] = (acc_ref[...] + b_ref[...]).astype(o_ref.dtype)


def _pick_divisor(dim, candidates, default):
    for c in candidates:
        if c <= dim and dim % c == 0:
            return c
    return default


def linear_1x1_conv(x_nchw, weight, bias):
    """1x1 Conv2d forward (== torch.nn.Conv2d(c_in, c_out, 1)).

    x_nchw: (N, C_in, H, W) float32
    weight: (C_out, C_in, 1, 1) float32   (PyTorch layout)
    bias:   (C_out,) float32
    returns (N, C_out, H, W) float32
    """
    N, C_in, H, W = x_nchw.shape
    C_out = weight.shape[0]
    HW = H * W

    # Free reshapes only -- no data movement in the wrapper.
    x3 = x_nchw.reshape(N, C_in, HW)       # (N, C_in, H*W)
    w_mat = weight.reshape(C_out, C_in)    # (C_out, C_in)
    b_mat = bias.reshape(C_out, 1)         # broadcast over H*W lanes

    # ---------------- tile selection ----------------
    # K (C_in) tile: it is the *last* dim of the weight block, so it must be a
    # multiple of 128 or equal the full C_in.
    if C_in % 128 == 0:
        tk = _pick_divisor(C_in, (512, 256, 128), C_in)
    else:
        tk = C_in
    # C_out tile: sublane constraint only (multiple of 8 or full).
    if C_out <= 256:
        tco = C_out
    else:
        tco = _pick_divisor(C_out, (256, 128, 64, 32, 16, 8), C_out)

    # H*W tile (lane dim of x and out): largest multiple of 128 fitting a
    # conservative VMEM budget (double-buffered input/output tiles + weight
    # tiles + f32 accumulator).  12 MiB keeps plenty of headroom even on
    # v7x (64 MiB physical / 32 MiB default scoped VMEM) and v5e's 16 MiB
    # default scoped limit.
    budget = 12 * 1024 * 1024

    def _fits(thw_c):
        need = 4 * (2 * tk * thw_c        # x tile, double buffered
                    + 2 * tco * tk        # weight tile, double buffered
                    + 2 * tco * thw_c     # output tile, double buffered
                    + tco * thw_c         # f32 accumulator scratch
                    + 2 * tco)            # bias
        return need <= budget

    if HW % 128 == 0:
        thw = 128
        for cand in (4096, 2048, 1024, 512, 256):
            if HW % cand == 0 and _fits(cand):
                thw = cand
                break
    else:
        thw = HW  # full-extent block (legal even when not a multiple of 128)

    grid = (N, C_out // tco, HW // thw, C_in // tk)

    flops = 2 * N * HW * C_in * C_out
    bytes_accessed = 4 * (N * C_in * HW + C_in * C_out + C_out + N * C_out * HW)

    out3 = pl.pallas_call(
        _conv1x1_kernel,
        out_shape=jax.ShapeDtypeStruct((N, C_out, HW), x_nchw.dtype),
        grid_spec=pltpu.PrefetchScalarGridSpec(
            num_scalar_prefetch=0,
            grid=grid,
            in_specs=[
                pl.BlockSpec((1, tk, thw), lambda n, co, hw, k: (n, k, hw)),
                pl.BlockSpec((tco, tk), lambda n, co, hw, k: (co, k)),
                pl.BlockSpec((tco, 1), lambda n, co, hw, k: (co, 0)),
            ],
            out_specs=pl.BlockSpec((1, tco, thw),
                                   lambda n, co, hw, k: (n, co, hw)),
            scratch_shapes=[pltpu.VMEM((tco, thw), jnp.float32)],
        ),
        compiler_params=pltpu.CompilerParams(
            dimension_semantics=("parallel", "parallel", "parallel", "arbitrary"),
            vmem_limit_bytes=32 * 1024 * 1024,
        ),
        cost_estimate=pl.CostEstimate(
            flops=flops, transcendentals=0, bytes_accessed=bytes_accessed),
    )(x3, w_mat, b_mat)

    # Free reshape back to NCHW.
    return out3.reshape(N, C_out, H, W)


def init_params(key, c_in, c_out):
    """Deterministic init matching torch Conv2d default ranges."""
    k_w, k_b = jax.random.split(key)
    fan_in = c_in * 1 * 1
    bound = 1.0 / jnp.sqrt(fan_in)
    weight = jax.random.uniform(k_w, (c_out, c_in, 1, 1), jnp.float32, -bound, bound)
    bias = jax.random.uniform(k_b, (c_out,), jnp.float32, -bound, bound)
    return weight, bias


if __name__ == "__main__":
    key = jax.random.PRNGKey(0)
    k_x, k_p = jax.random.split(key)

    N, C_in, H, W = 2, 4, 16, 16
    C_out = 8

    x = jax.random.normal(k_x, (N, C_in, H, W), dtype=jnp.float32)
    weight, bias = init_params(k_p, C_in, C_out)

    out = linear_1x1_conv(x, weight, bias)
    out = jax.block_until_ready(out)

    # Cross-check against a plain JAX reference.
    ref = (jnp.einsum("nchw,oc->nohw", x, weight.reshape(C_out, C_in))
           + bias[None, :, None, None])
    assert out.shape == (N, C_out, H, W)
    assert jnp.allclose(out, ref, atol=1e-5, rtol=1e-5)

    print("KERNEL_OK")
</pallas_src>

<mosaic_0001>
module attributes {stable_mosaic.version = 11 : i64} {
  func.func @_conv1x1_kernel(%arg0: i32, %arg1: i32, %arg2: i32, %arg3: i32, %arg4: memref<1x4x256xf32, #tpu.memory_space<vmem>>, %arg5: memref<8x4xf32, #tpu.memory_space<vmem>>, %arg6: memref<8x1xf32, #tpu.memory_space<vmem>>, %arg7: memref<1x8x256xf32, #tpu.memory_space<vmem>>, %arg8: memref<8x256xf32, #tpu.memory_space<vmem>>) attributes {dimension_semantics = [#tpu.dimension_semantics<parallel>, #tpu.dimension_semantics<parallel>, #tpu.dimension_semantics<parallel>, #tpu.dimension_semantics<arbitrary>], iteration_bounds = array<i64: 2, 1, 1, 1>, scalar_prefetch = 0 : i64, scratch_operands = 1 : i64, tpu.core_type = #tpu.core_type<tc>, window_params = [{transform_indices = @transform_0, window_bounds = array<i64: 1, 4, 256>}, {transform_indices = @transform_1, window_bounds = array<i64: 8, 4>}, {transform_indices = @transform_2, window_bounds = array<i64: 8, 1>}, {transform_indices = @transform_3, window_bounds = array<i64: 1, 8, 256>}]} {
    %c0_i32 = arith.constant 0 : i32
    %0 = arith.cmpi eq, %arg3, %c0_i32 : i32
    %1 = arith.extui %0 : i1 to i32
    %c0_i32_0 = arith.constant 0 : i32
    %2 = arith.cmpi ne, %1, %c0_i32_0 : i32
    scf.if %2 {
      %cst_11 = arith.constant 0.000000e+00 : f32
      %13 = vector.broadcast %cst_11 : f32 to vector<8x256xf32>
      %c0_12 = arith.constant 0 : index
      %c0_13 = arith.constant 0 : index
      %14 = vector.load %arg8[%c0_12, %c0_13] : memref<8x256xf32, #tpu.memory_space<vmem>>, vector<8x256xf32>
      tpu.vector_store %arg8[%c0_12, %c0_13], %13 {strides = array<i32>} : memref<8x256xf32, #tpu.memory_space<vmem>>, vector<8x256xf32>,
    } else {
    }
    %c0 = arith.constant 0 : index
    %c0_1 = arith.constant 0 : index
    %3 = vector.load %arg8[%c0, %c0_1] : memref<8x256xf32, #tpu.memory_space<vmem>>, vector<8x256xf32>
    %c0_2 = arith.constant 0 : index
    %c0_3 = arith.constant 0 : index
    %4 = vector.load %arg5[%c0_2, %c0_3] : memref<8x4xf32, #tpu.memory_space<vmem>>, vector<8x4xf32>
    %c0_4 = arith.constant 0 : index
    %c0_5 = arith.constant 0 : index
    %c0_6 = arith.constant 0 : index
    %5 = vector.load %arg4[%c0_4, %c0_5, %c0_6] : memref<1x4x256xf32, #tpu.memory_space<vmem>>, vector<1x4x256xf32>
    %6 = vector.shape_cast %5 : vector<1x4x256xf32> to vector<4x256xf32>
    %cst = arith.constant dense<0.000000e+00> : vector<8x256xf32>
    %7 = tpu.matmul %4, %6, %cst {dimension_numbers = #tpu.dot_dimension_numbers<[1], [0], [0], [1], [0, 0, 1, 1], [], []>} : vector<8x4xf32>, vector<4x256xf32>, vector<8x256xf32> -> vector<8x256xf32>
    %8 = arith.addf %3, %7 : vector<8x256xf32>
    %c0_7 = arith.constant 0 : index
    %c0_8 = arith.constant 0 : index
    %9 = vector.load %arg8[%c0_7, %c0_8] : memref<8x256xf32, #tpu.memory_space<vmem>>, vector<8x256xf32>
    tpu.vector_store %arg8[%c0_7, %c0_8], %8 {strides = array<i32>} : memref<8x256xf32, #tpu.memory_space<vmem>>, vector<8x256xf32>,
    %c0_i32_9 = arith.constant 0 : i32
    %10 = arith.cmpi eq, %arg3, %c0_i32_9 : i32
    %11 = arith.extui %10 : i1 to i32
    %c0_i32_10 = arith.constant 0 : i32
    %12 = arith.cmpi ne, %11, %c0_i32_10 : i32
    scf.if %12 {
      %c0_11 = arith.constant 0 : index
      %c0_12 = arith.constant 0 : index
      %13 = vector.load %arg8[%c0_11, %c0_12] : memref<8x256xf32, #tpu.memory_space<vmem>>, vector<8x256xf32>
      %c0_13 = arith.constant 0 : index
      %c0_14 = arith.constant 0 : index
      %14 = vector.load %arg6[%c0_13, %c0_14] : memref<8x1xf32, #tpu.memory_space<vmem>>, vector<8x1xf32>
      %15 = vector.broadcast %14 : vector<8x1xf32> to vector<8x256xf32>
      %16 = arith.addf %13, %15 : vector<8x256xf32>
      %c0_15 = arith.constant 0 : index
      %c0_16 = arith.constant 0 : index
      %c0_17 = arith.constant 0 : index
      %17 = vector.load %arg7[%c0_15, %c0_16, %c0_17] : memref<1x8x256xf32, #tpu.memory_space<vmem>>, vector<1x8x256xf32>
      %18 = vector.shape_cast %17 : vector<1x8x256xf32> to vector<8x256xf32>
      %19 = vector.shape_cast %16 : vector<8x256xf32> to vector<1x8x256xf32>
      tpu.vector_store %arg7[%c0_15, %c0_16, %c0_17], %19 {strides = array<i32>} : memref<1x8x256xf32, #tpu.memory_space<vmem>>, vector<1x8x256xf32>,
    } else {
    }
    return
  }
  func.func @transform_0(%arg0: i32, %arg1: i32, %arg2: i32, %arg3: i32) -> (i32, i32, i32) {
    %c0_i32 = arith.constant 0 : i32
    return %arg0, %arg3, %arg2 : i32, i32, i32
  }
  func.func @transform_1(%arg0: i32, %arg1: i32, %arg2: i32, %arg3: i32) -> (i32, i32) {
    %c0_i32 = arith.constant 0 : i32
    return %arg1, %arg3 : i32, i32
  }
  func.func @transform_2(%arg0: i32, %arg1: i32, %arg2: i32, %arg3: i32) -> (i32, i32) {
    %c0_i32 = arith.constant 0 : i32
    %c0_i32_0 = arith.constant 0 : i32
    return %arg1, %c0_i32 : i32, i32
  }
  func.func @transform_3(%arg0: i32, %arg1: i32, %arg2: i32, %arg3: i32) -> (i32, i32, i32) {
    %c0_i32 = arith.constant 0 : i32
    return %arg0, %arg1, %arg2 : i32, i32, i32
  }
}

</mosaic_0001>

<llo_original>
// kernel: tpu_custom_call.1
$region0: #{tpu_custom_call.1}
  #allocation0 [shape = 'u32[]', space=smem, size = 0x4, offset = 0x4, fixed_abs, tag = 'smem constant byte address 0x4 - core index']
  #allocation1 [shape = 'u32[144,128]{1,0:T(1,128)}', space=vmem, size = 0x12000, scoped, tag = 'internal scratch']
  #allocation2 [shape = 'f32[8,256]{1,0:T(8,128)}', space=vmem, size = 0x2000, scoped, tag = 'scratch operand']
  %s0 = inlined_call_operand.vmem [shape: f32[2,4,256], index: 0, kind: input, shape index: {}]
  %s1 = inlined_call_operand.vmem [shape: f32[8,4], index: 1, kind: input, shape index: {}]
  %s2 = inlined_call_operand.vmem [shape: f32[8,1], index: 2, kind: input, shape index: {}]
  %s3 = inlined_call_operand.hbm [shape: f32[2,8,256], index: 3, kind: output, shape index: {}]
  %s4 = sld [smem:[#allocation0]]
  $region53: #{tpu_custom_call.1} parent=0
    _
  %s6 = ssub.s32 1, %s4
  %s7 = scalar_select 0, %s6, %s4
  $region1: #{tpu_custom_call.1} parent=0
    #allocation3 [shape = 'u8[16384]{0}', space=vmem, size = 0x4000, scoped, tag = 'output window, operand 0']
    #allocation4 [shape = 's32[2]{0}', space=sflag, size = 0x8, scoped, tag = 'scoped memory for tpu_custom_call.1']
    %8 = vsyncpa [#allocation4], 0
    %s9 = scalar_lea.sflag [#allocation4], 1
    %10 = vsyncpa %s9, 0
    loop: start=0, step=1, limit=4
    $region2: #{tpu_custom_call.1} parent=1 // loop_pre_header
      _
    $region3: #{tpu_custom_call.1} parent=1 // loop_header
      %s12 = sphi 0, %s16
      %p13 = scmp.ge.s32.totalorder %s12, 4
      %s19 = sphi 0, %s45
      %s20 = sphi 0, %s41
      %s21 = sphi 0, %s37
      %s22 = sphi 0, %s33
      %s23 = sphi 0, %s19
      %s24 = sphi 0, %s20
      %s25 = sphi 0, %s21
      %s26 = sphi 0, %s22
      %s27 = sphi 0, %s23
      %s28 = sphi 0, %s24
      %s29 = sphi 0, %s25
      %s30 = sphi 0, %s26
      %s52 = sphi 0, %s54
      %s55 = sphi 0, %s52
      %s56 = sphi 0, %s55
      %s72 = sphi 0, %s56
      %s80 = sphi 0, %s82
      %s83 = sphi 0, %s80
      %s84 = sphi 0, %s83
      %s100 = sphi 0, %s84
      %s106 = sphi 0, %s108
      %s109 = sphi 0, %s106
      %s110 = sphi 0, %s109
      %s126 = sphi 0, %s110
      %s136 = sphi 0, %s138
      %s139 = sphi 0, %s136
      %s140 = sphi 0, %s139
      %s156 = sphi 0, %s140
    $region4: #{tpu_custom_call.1} parent=1 // loop_header_branch
      %15 = sbr.rel (%p13) target = $region8
    $region5: #{tpu_custom_call.1} parent=1 // loop_body
      %s17 = ssub.s32 %s12, 1
      %s18 = ssub.s32 %s12, 2
      %s31 = sadd.s32 1, %s22
      %p32 = scmp.ge.s32.totalorder %s31, 1
      %s33 = scalar_select %p32, 0, %s31
      %s34 = sadd.s32 1, %s21
      %s35 = scalar_select %p32, %s34, %s21
      %p36 = scmp.ge.s32.totalorder %s35, 1
      %s37 = scalar_select %p36, 0, %s35
      %s38 = sadd.s32 1, %s20
      %s39 = scalar_select %p36, %s38, %s20
      %p40 = scmp.ge.s32.totalorder %s39, 1
      %s41 = scalar_select %p40, 0, %s39
      %s42 = sadd.s32 1, %s19
      %s43 = scalar_select %p40, %s42, %s19
      %p44 = scmp.ge.s32.totalorder %s43, 2
      %s45 = scalar_select %p44, 0, %s43
      %s46 = ssub.s32 %s19, %s45
      %s47 = ssub.s32 %s22, %s33
      %s48 = sor.u32 %s46, %s47
      %s49 = ssub.s32 %s21, %s37
      %s50 = sor.u32 %s48, %s49
      %p51 = scmp.eq.s32.totalorder %s50, 0
      %s53 = sadd.s32 %s52, 1
      %s54 = scalar_select %p51, %s52, %s53
      %p57 = pneg %p51
      %p58 = scmp.eq.s32.totalorder %s12, 1
      %p59 = por %p57, %p58
      %p60 = scmp.ne.s32.totalorder %s52, %s55
      %p61 = scmp.eq.s32.totalorder %s12, 0
      %p62 = por %p60, %p61
      %p63 = scmp.ne.s32.totalorder %s52, %s55
      %p64 = scmp.eq.s32.totalorder %s17, 1
      %p65 = por %p63, %p64
      %p66 = scmp.ne.s32.totalorder %s55, %s56
      %p67 = scmp.eq.s32.totalorder %s17, 0
      %p68 = por %p66, %p67
      %p69 = scmp.ne.s32.totalorder %s55, %s56
      %p70 = scmp.eq.s32.totalorder %s18, 1
      %p71 = por %p69, %p70
      %p73 = scmp.ne.s32.totalorder %s56, %s72
      %p74 = scmp.eq.s32.totalorder %s18, 0
      %p75 = por %p73, %p74
      %s76 = ssub.s32 %s20, %s41
      %s77 = ssub.s32 %s22, %s33
      %s78 = sor.u32 %s76, %s77
      %p79 = scmp.eq.s32.totalorder %s78, 0
      %s81 = sadd.s32 %s80, 1
      %s82 = scalar_select %p79, %s80, %s81
      %p85 = pneg %p79
      %p86 = scmp.eq.s32.totalorder %s12, 1
      %p87 = por %p85, %p86
      %p88 = scmp.ne.s32.totalorder %s80, %s83
      %p89 = scmp.eq.s32.totalorder %s12, 0
      %p90 = por %p88, %p89
      %p91 = scmp.ne.s32.totalorder %s80, %s83
      %p92 = scmp.eq.s32.totalorder %s17, 1
      %p93 = por %p91, %p92
      %p94 = scmp.ne.s32.totalorder %s83, %s84
      %p95 = scmp.eq.s32.totalorder %s17, 0
      %p96 = por %p94, %p95
      %p97 = scmp.ne.s32.totalorder %s83, %s84
      %p98 = scmp.eq.s32.totalorder %s18, 1
      %p99 = por %p97, %p98
      %p101 = scmp.ne.s32.totalorder %s84, %s100
      %p102 = scmp.eq.s32.totalorder %s18, 0
      %p103 = por %p101, %p102
      %s104 = ssub.s32 %s20, %s41
      %p105 = scmp.eq.s32.totalorder %s104, 0
      %s107 = sadd.s32 %s106, 1
      %s108 = scalar_select %p105, %s106, %s107
      %p111 = pneg %p105
      %p112 = scmp.eq.s32.totalorder %s12, 1
      %p113 = por %p111, %p112
      %p114 = scmp.ne.s32.totalorder %s106, %s109
      %p115 = scmp.eq.s32.totalorder %s12, 0
      %p116 = por %p114, %p115
      %p117 = scmp.ne.s32.totalorder %s106, %s109
      %p118 = scmp.eq.s32.totalorder %s17, 1
      %p119 = por %p117, %p118
      %p120 = scmp.ne.s32.totalorder %s109, %s110
      %p121 = scmp.eq.s32.totalorder %s17, 0
      %p122 = por %p120, %p121
      %p123 = scmp.ne.s32.totalorder %s109, %s110
      %p124 = scmp.eq.s32.totalorder %s18, 1
      %p125 = por %p123, %p124
      %p127 = scmp.ne.s32.totalorder %s110, %s126
      %p128 = scmp.eq.s32.totalorder %s18, 0
      %p129 = por %p127, %p128
      %s130 = ssub.s32 %s19, %s45
      %s131 = ssub.s32 %s20, %s41
      %s132 = sor.u32 %s130, %s131
      %s133 = ssub.s32 %s21, %s37
      %s134 = sor.u32 %s132, %s133
      %p135 = scmp.eq.s32.totalorder %s134, 0
      %s137 = sadd.s32 %s136, 1
      %s138 = scalar_select %p135, %s136, %s137
      %p141 = pneg %p135
      %p142 = scmp.eq.s32.totalorder %s12, 1
      %p143 = por %p141, %p142
      %p144 = scmp.ne.s32.totalorder %s136, %s139
      %p145 = scmp.eq.s32.totalorder %s12, 0
      %p146 = por %p144, %p145
      %p147 = scmp.ne.s32.totalorder %s136, %s139
      %p148 = scmp.eq.s32.totalorder %s17, 1
      %p149 = por %p147, %p148
      %p150 = scmp.ne.s32.totalorder %s139, %s140
      %p151 = scmp.eq.s32.totalorder %s17, 0
      %p152 = por %p150, %p151
      %p153 = scmp.ne.s32.totalorder %s139, %s140
      %p154 = scmp.eq.s32.totalorder %s18, 1
      %p155 = por %p153, %p154
      %p157 = scmp.ne.s32.totalorder %s140, %s156
      %p158 = scmp.eq.s32.totalorder %s18, 0
      %p159 = por %p157, %p158
      %p160 = scmp.le.s32.totalorder 1, %s12
      %p161 = scmp.lt.s32.totalorder %s12, 3
      %p162 = pnand %p160, %p161
      %p163 = pneg %p162
      // Predicated region
      $region9: #{tpu_custom_call.1} parent=5 // pred_check
        _
      $region10: #{tpu_custom_call.1} parent=5 // pred_check_branch
        %165 = sbr.rel (%p162) target = $region12
      $region11: #{tpu_custom_call.1} parent=5 // pred_region
        %s166 = ssub.s32 %s12, 1
        // Predicated region
        $region13: #{tpu_custom_call.1} parent=11 // pred_check
          %p167 = pneg %p96
        $region14: #{tpu_custom_call.1} parent=11 // pred_check_branch
          %169 = sbr.rel (%p167) target = $region16
        $region15: #{tpu_custom_call.1} parent=11 // pred_region
          %p170 = scmp.lt.s32.totalorder %s24, 0
          %s171 = scalar_select %p170, %s24, 0
          %p172 = scmp.lt.s32.totalorder %s26, 0
          %s173 = scalar_select %p172, %s26, 0
          %s174 = sadd.s32 %s173, %s171
          %s175 = smul.addr %s174, 8
          %s176 = scalar_lea.vmem %s1, %s175
        $region16: #{tpu_custom_call.1} parent=11 // pred_fallthru
          _
        // Predicated region
        $region17: #{tpu_custom_call.1} parent=11 // pred_check
          %p177 = pneg %p122
        $region18: #{tpu_custom_call.1} parent=11 // pred_check_branch
          %179 = sbr.rel (%p177) target = $region20
        $region19: #{tpu_custom_call.1} parent=11 // pred_region
          %p180 = scmp.lt.s32.totalorder %s24, 0
          %s181 = scalar_select %p180, %s24, 0
          %s182 = smul.addr %s181, 8
          %s183 = scalar_lea.vmem %s2, %s182
        $region20: #{tpu_custom_call.1} parent=11 // pred_fallthru
          _
      $region12: #{tpu_custom_call.1} parent=5 // pred_fallthru
        _
      %p184 = scmp.lt.s32.totalorder %s12, 2
      // Predicated region
      $region21: #{tpu_custom_call.1} parent=5 // pred_check
        %p185 = pneg %p184
      $region22: #{tpu_custom_call.1} parent=5 // pred_check_branch
        %187 = sbr.rel (%p185) target = $region24
      $region23: #{tpu_custom_call.1} parent=5 // pred_region
        // Predicated region
        $region25: #{tpu_custom_call.1} parent=23 // pred_check
          %p188 = pneg %p62
        $region26: #{tpu_custom_call.1} parent=23 // pred_check_branch
          %190 = sbr.rel (%p188) target = $region28
        $region27: #{tpu_custom_call.1} parent=23 // pred_region
          %s191 = smul.u32 2, %s21
          %p192 = scmp.lt.s32.totalorder %s19, 1
          %s193 = scalar_select %p192, %s19, 1
          %p194 = scmp.lt.s32.totalorder %s22, 0
          %s195 = scalar_select %p194, %s22, 0
          %p196 = scmp.lt.s32.totalorder %s191, 1
          %s197 = scalar_select %p196, %s191, 1
          %s198 = smul.addr %s195, 2
          %s199 = sadd.s32 %s197, %s198
          %s200 = smul.addr %s193, 2
          %s201 = sadd.s32 %s199, %s200
          %s202 = smul.addr %s201, 4
          %s203 = scalar_lea.vmem %s0, %s202
          %s204 = smul.u32 2, %s21
        $region28: #{tpu_custom_call.1} parent=23 // pred_fallthru
          _
      $region24: #{tpu_custom_call.1} parent=5 // pred_fallthru
        _
      %p205 = scmp.le.s32.totalorder 1, %s12
      %p206 = scmp.lt.s32.totalorder %s12, 3
      %p207 = pnand %p205, %p206
      %p208 = pneg %p207
      // Predicated region
      $region29: #{tpu_custom_call.1} parent=5 // pred_check
        _
      $region30: #{tpu_custom_call.1} parent=5 // pred_check_branch
        %210 = sbr.rel (%p207) target = $region32
      $region31: #{tpu_custom_call.1} parent=5 // pred_region
        %s211 = ssub.s32 %s12, 1
        %s212 = smul.u32 2, %s25
        %p213 = scmp.lt.s32.totalorder %s23, 1
        %s214 = scalar_select %p213, %s23, 1
        %p215 = scmp.lt.s32.totalorder %s26, 0
        %s216 = scalar_select %p215, %s26, 0
        %p217 = scmp.lt.s32.totalorder %s212, 1
        %s218 = scalar_select %p217, %s212, 1
        %s219 = smul.addr %s216, 2
        %s220 = sadd.s32 %s218, %s219
        %s221 = smul.addr %s214, 2
        %s222 = sadd.s32 %s220, %s221
        %s223 = smul.addr %s222, 4
        %s224 = scalar_lea.vmem %s0, %s223
        %p225 = pneg %p68
        %p226 = pneg %p65
        %p227 = scmp.lt.s32.totalorder %s24, 0
        %s228 = scalar_select %p227, %s24, 0
        %p229 = scmp.lt.s32.totalorder %s26, 0
        %s230 = scalar_select %p229, %s26, 0
        %s231 = sadd.s32 %s230, %s228
        %s232 = smul.addr %s231, 8
        %s233 = scalar_lea.vmem %s1, %s232
        %p234 = pneg %p96
        %p235 = pneg %p93
        %p236 = scmp.lt.s32.totalorder %s24, 0
        %s237 = scalar_select %p236, %s24, 0
        %s238 = smul.addr %s237, 8
        %s239 = scalar_lea.vmem %s2, %s238
        %p240 = pneg %p122
        %p241 = pneg %p119
        %p242 = pneg %p152
        %p243 = pneg %p149
        %s244 = sand.u32 %s139, 1
        %s245 = scalar_lea.sflag [#allocation4], %s244
        %s246 = sand.u32 %s139, 1
        %s247 = smul.addr %s246, 16
        %s248 = scalar_lea.vmem [#allocation3], %s247
        %s249 = smul.u32 2, %s25
        %p250 = scmp.lt.s32.totalorder %s23, 1
        %s251 = scalar_select %p250, %s23, 1
        %p252 = scmp.lt.s32.totalorder %s26, 0
        %s253 = scalar_select %p252, %s26, 0
        %p254 = scmp.lt.s32.totalorder %s249, 1
        %s255 = scalar_select %p254, %s249, 1
        %s256 = smul.addr %s253, 2
        %s257 = sadd.s32 %s255, %s256
        %s258 = smul.addr %s251, 2
        %s259 = sadd.s32 %s257, %s258
        %s260 = smul.addr %s259, 4
        %s261 = scalar_lea.vmem %s0, %s260
        %s262 = smul.u32 2, %s25
        %p263 = scmp.lt.s32.totalorder %s24, 0
        %s264 = scalar_select %p263, %s24, 0
        %p265 = scmp.lt.s32.totalorder %s26, 0
        %s266 = scalar_select %p265, %s26, 0
        %s267 = sadd.s32 %s266, %s264
        %s268 = smul.addr %s267, 8
        %s269 = scalar_lea.vmem %s1, %s268
        %p270 = scmp.lt.s32.totalorder %s24, 0
        %s271 = scalar_select %p270, %s24, 0
        %s272 = smul.addr %s271, 8
        %s273 = scalar_lea.vmem %s2, %s272
        %s274 = smul.u32 2, %s25
        %p275 = scmp.eq.s32.totalorder %s26, 0
        // Predicated region
        $region33: #{tpu_custom_call.1} parent=31 // pred_check
          %p276 = pneg %p275
        $region34: #{tpu_custom_call.1} parent=31 // pred_check_branch
          %278 = sbr.rel (%p276) target = $region36
        $region35: #{tpu_custom_call.1} parent=31 // pred_region
          %279 = vst [vmem:[#allocation2] sm:$0xff] 0.0
          %280 = vst [vmem:[#allocation2 + $0x8] sm:$0xff] 0.0
        $region36: #{tpu_custom_call.1} parent=31 // pred_fallthru
          _
        %v281 = vld [vmem:[#allocation2] sm:$0xff]
        %v282 = vld [vmem:[#allocation2 + $0x8] sm:$0xff]
        %v283 = vld [vmem:[%s269] sm:$0xff]
        %v284 = vld [vmem:[%s261] sm:$0xff]
        %v286 = vcombine.high %v284, %v284
        %vm287 = vcmask 31744
        %v289 = vsel %vm287, %v283, 0
        %vm291 = vcmask 1043456
        %v292 = vsel %vm291, %v284, 0
        %v294 = vsel %vm291, %v286, 0
        %296 = vmatprep.subr.mxu0 0.0
        %297 = vmatpush1.msra.mxu0 0.0
        %298 = vmatprep.subr.mxu0 0.0
        %299 = vmatpush1.msra.mxu0 0.0
        %300 = vmatprep.subr.mxu0 0.0
        %301 = vmatpush1.msra.mxu0 0.0
        %302 = vmatprep.subr.mxu0 0.0
        %303 = vmatpush1.msra.mxu0 0.0
        %304 = vmatprep.subr.mxu0 0.0
        %305 = vmatpush1.msra.mxu0 0.0
        %306 = vmatprep.subr.mxu0 0.0
        %307 = vmatpush1.msra.mxu0 0.0
        %308 = vmatprep.subr.mxu0 0.0
        %309 = vmatpush1.msra.mxu0 0.0
        %310 = vmatprep.subr.mxu0 0.0
        %311 = vmatpush1.msra.mxu0 0.0
        %312 = vmatprep.subr.mxu0 0.0
        %313 = vmatpush1.msra.mxu0 0.0
        %314 = vmatprep.subr.mxu0 0.0
        %315 = vmatpush1.msra.mxu0 0.0
        %316 = vmatprep.subr.mxu0 0.0
        %317 = vmatpush1.msra.mxu0 0.0
        %318 = vmatprep.subr.mxu0 0.0
        %319 = vmatpush1.msra.mxu0 0.0
        %320 = vmatprep.subr.mxu0 0.0
        %321 = vmatpush1.msra.mxu0 0.0
        %322 = vmatprep.subr.mxu0 0.0
        %323 = vmatpush1.msra.mxu0 0.0
        %324 = vmatprep.subr.mxu0 0.0
        %325 = vmatpush1.msra.mxu0 0.0
        %326 = vmatprep.subr.mxu0 %v294
        %327 = vmatpush1.msra.mxu0 %v292
        %328 = vmatprep.subr.mxu0 0.0
        %329 = vmatpush2.msra.mxu0 0.0
        %330 = vmatprep.subr.mxu0 0.0
        %331 = vmatpush2.msra.mxu0 0.0
        %332 = vmatprep.subr.mxu0 0.0
        %333 = vmatpush2.msra.mxu0 0.0
        %334 = vmatprep.subr.mxu0 0.0
        %335 = vmatpush2.msra.mxu0 0.0
        %336 = vmatprep.subr.mxu0 0.0
        %337 = vmatpush2.msra.mxu0 0.0
        %338 = vmatprep.subr.mxu0 0.0
        %339 = vmatpush2.msra.mxu0 0.0
        %340 = vmatprep.subr.mxu0 0.0
        %341 = vmatpush2.msra.mxu0 0.0
        %342 = vmatprep.subr.mxu0 0.0
        %343 = vmatpush2.msra.mxu0 0.0
        %344 = vmatprep.subr.mxu0 0.0
        %345 = vmatpush2.msra.mxu0 0.0
        %346 = vmatprep.subr.mxu0 0.0
        %347 = vmatpush2.msra.mxu0 0.0
        %348 = vmatprep.subr.mxu0 0.0
        %349 = vmatpush2.msra.mxu0 0.0
        %350 = vmatprep.subr.mxu0 0.0
        %351 = vmatpush2.msra.mxu0 0.0
        %352 = vmatprep.subr.mxu0 0.0
        %353 = vmatpush2.msra.mxu0 0.0
        %354 = vmatprep.subr.mxu0 0.0
        %355 = vmatpush2.msra.mxu0 0.0
        %356 = vmatprep.subr.mxu0 0.0
        %357 = vmatpush2.msra.mxu0 0.0
        %358 = vmatprep.subr.mxu0 0.0
        %359 = vmatpush2.msra.mxu0 0.0
        %360 = vmatprep.mubr.f32.mxu0 0.0
        %361 = vmatmul.mubr.f32.gmra.mxu0 %v289
        %v362 = vpop.f32.mrf.mxu0
        %v363 = vadd.f32 0.0, %v362
        %v364 = vpop.f32.mrf.mxu0
        %v365 = vadd.f32 0.0, %v364
        %366 = vdwg.mxu0
        %v367 = vadd.f32 %v281, %v363
        %v368 = vadd.f32 %v282, %v365
        %369 = vst [vmem:[#allocation2] sm:$0xff] %v367
        %370 = vst [vmem:[#allocation2 + $0x8] sm:$0xff] %v368
        // Predicated region
        $region37: #{tpu_custom_call.1} parent=31 // pred_check
          %p371 = pneg %p275
        $region38: #{tpu_custom_call.1} parent=31 // pred_check_branch
          %373 = sbr.rel (%p371) target = $region40
        $region39: #{tpu_custom_call.1} parent=31 // pred_region
          %v374 = vld [vmem:[#allocation2] sm:$0xff]
          %v375 = vld [vmem:[#allocation2 + $0x8] sm:$0xff]
          %v376 = vld [vmem:[%s273] sm:$0xff]
          %378 = vset.pattern.permute.xlu0 0
          %379 = vperm.xlu0 %378, %v376
          %v380 = vpop.permute.xlu0 %379
          %v382 = vadd.f32 %v374, %v380
          %v383 = vadd.f32 %v375, %v380
          %384 = vst [vmem:[%s248] sm:$0xff] %v382
          %385 = vst [vmem:[%s248 + $0x8] sm:$0xff] %v383
        $region40: #{tpu_custom_call.1} parent=31 // pred_fallthru
          _
        %s386 = sand.u32 %s139, 1
        %s387 = scalar_lea.sflag [#allocation4], %s386
        %s388 = sand.u32 %s139, 1
        %s389 = smul.addr %s388, 16
        %s390 = scalar_lea.vmem [#allocation3], %s389
        // Predicated region
        $region41: #{tpu_custom_call.1} parent=31 // pred_check
          %p391 = pneg %p149
        $region42: #{tpu_custom_call.1} parent=31 // pred_check_branch
          %393 = sbr.rel (%p391) target = $region44
        $region43: #{tpu_custom_call.1} parent=31 // pred_region
          %s394 = smul.u32 2, %s25
          %s396 = ssub.s32 256, 256
          %397 = vsyncadd %s387, %s396
          %s398 = smul.addr %s24, 2
          %s399 = sadd.s32 %s394, %s398
          %s400 = smul.addr %s23, 2
          %s401 = sadd.s32 %s399, %s400
          %s402 = smul.addr %s401, 128
          %s403 = scalar_lea.hbm %s3, %s402
          %s405 = sshll.u32 %s390, 4
          %s406 = int_to_ptr.vmem [resolvable:$true] %s405
          %408 = dma.vmem_to_hbm [thread:$0]  %s406, 256, %s403, %s387
        $region44: #{tpu_custom_call.1} parent=31 // pred_fallthru
          _
      $region32: #{tpu_custom_call.1} parent=5 // pred_fallthru
        _
      %p409 = scmp.le.s32.totalorder 2, %s12
      // Predicated region
      $region45: #{tpu_custom_call.1} parent=5 // pred_check
        %p410 = pneg %p409
      $region46: #{tpu_custom_call.1} parent=5 // pred_check_branch
        %412 = sbr.rel (%p410) target = $region48
      $region47: #{tpu_custom_call.1} parent=5 // pred_region
        %s413 = ssub.s32 %s12, 2
        // Predicated region
        $region49: #{tpu_custom_call.1} parent=47 // pred_check
          %p414 = pneg %p155
        $region50: #{tpu_custom_call.1} parent=47 // pred_check_branch
          %416 = sbr.rel (%p414) target = $region52
        $region51: #{tpu_custom_call.1} parent=47 // pred_region
          %s417 = sand.u32 %s140, 1
          %s418 = scalar_lea.sflag [#allocation4], %s417
          %s419 = sand.u32 %s140, 1
          %s420 = smul.addr %s419, 16
          %s421 = scalar_lea.vmem [#allocation3], %s420
          %422 = dma.done %s418, 256
        $region52: #{tpu_custom_call.1} parent=47 // pred_fallthru
          _
      $region48: #{tpu_custom_call.1} parent=5 // pred_fallthru
        _
    $region6: #{tpu_custom_call.1} parent=1 // loop_footer
      %s16 = sadd.s32 1, %s12
    $region7: #{tpu_custom_call.1} parent=1 // loop_footer_branch
      %11 = sbr.rel target = $region3
    $region8: #{tpu_custom_call.1} parent=1 // loop_exit
      _
    %423 = vsyncpa [#allocation4], 1
    %s424 = scalar_lea.sflag [#allocation4], 1
    %425 = vsyncpa %s424, 1

</llo_original>
